<compile_context>
chip_gen: v7x
topology: tpu7x:2x2x1
jax: 0.10.0
libtpu: 0.0.40
codegen_flags: <defaults>
</compile_context>

<pallas_src>
import functools

import jax
import jax.numpy as jnp
from jax.experimental import pallas as pl
from jax.experimental.pallas import tpu as pltpu

LANE = 128
DEFAULT_BLOCK_ROWS = 1024  # (1024, 128) f32 tile = 512 KiB; fits all generations


# ----------------------------------------------------------------------------
# Kernel 1: observer (calibration) — streaming global min / max reduction.
# ----------------------------------------------------------------------------
def _observer_kernel(x_ref, min_ref, max_ref, min_sc, max_sc, *, rows, tr):
    pid = pl.program_id(0)

    @pl.when(pid == 0)
    def _():
        min_sc[...] = jnp.full_like(min_sc, jnp.inf)
        max_sc[...] = jnp.full_like(max_sc, -jnp.inf)

    x = x_ref[...].astype(jnp.float32)

    if rows % tr != 0:
        # Ragged last block: out-of-bounds rows hold unspecified data; mask
        # them with +/-inf so they cannot affect the running min/max.
        row = jax.lax.broadcasted_iota(jnp.int32, x.shape, 0) + pid * tr
        valid = row < rows
        x_min_src = jnp.where(valid, x, jnp.inf)
        x_max_src = jnp.where(valid, x, -jnp.inf)
    else:
        x_min_src = x
        x_max_src = x

    min_sc[...] = jnp.minimum(min_sc[...], jnp.min(x_min_src).reshape(1, 1))
    max_sc[...] = jnp.maximum(max_sc[...], jnp.max(x_max_src).reshape(1, 1))

    @pl.when(pid == pl.num_programs(0) - 1)
    def _():
        min_ref[...] = min_sc[...]
        max_ref[...] = max_sc[...]


def _observe_min_max(x2d, tr):
    rows, lanes = x2d.shape
    grid = (pl.cdiv(rows, tr),)
    kernel = functools.partial(_observer_kernel, rows=rows, tr=tr)
    min_out, max_out = pl.pallas_call(
        kernel,
        out_shape=(
            jax.ShapeDtypeStruct((1, 1), jnp.float32),
            jax.ShapeDtypeStruct((1, 1), jnp.float32),
        ),
        grid=grid,
        in_specs=[pl.BlockSpec((tr, lanes), lambda i: (i, 0))],
        out_specs=(
            pl.BlockSpec((1, 1), lambda i: (0, 0)),
            pl.BlockSpec((1, 1), lambda i: (0, 0)),
        ),
        scratch_shapes=[
            pltpu.VMEM((1, 1), jnp.float32),
            pltpu.VMEM((1, 1), jnp.float32),
        ],
        compiler_params=pltpu.CompilerParams(
            dimension_semantics=("arbitrary",)),
    )(x2d)
    return min_out, max_out


# ----------------------------------------------------------------------------
# Kernel 2: fake-quantization with in-kernel qparam derivation.
# min/max arrive as (1, 1) f32 arrays; all qparam math stays in the vector
# domain (one (1,1) divide per tile), the big tile only sees mul/round/clip.
# ----------------------------------------------------------------------------
def _fake_quant_kernel(min_ref, max_ref, x_ref, o_ref, *, qmin, qmax):
    minv = jnp.minimum(min_ref[...], jnp.float32(0.0))   # (1,1), nudge to include 0
    maxv = jnp.maximum(max_ref[...], jnp.float32(0.0))   # (1,1)
    scale = jnp.maximum(
        (maxv - minv) / jnp.float32(qmax - qmin),
        jnp.float32(jnp.finfo(jnp.float32).eps))          # (1,1)
    inv_scale = jnp.float32(1.0) / scale                  # single divide per tile
    zp = jnp.clip(
        jnp.round(jnp.float32(qmin) - minv * inv_scale),
        jnp.float32(qmin), jnp.float32(qmax))              # (1,1)

    x = x_ref[...].astype(jnp.float32)
    q = jnp.clip(jnp.round(x * inv_scale) + zp,
                 jnp.float32(qmin), jnp.float32(qmax))
    o_ref[...] = ((q - zp) * scale).astype(o_ref.dtype)


def _fake_quantize_2d(x2d, min_val, max_val, qmin, qmax, tr):
    rows, lanes = x2d.shape
    grid = (pl.cdiv(rows, tr),)
    kernel = functools.partial(_fake_quant_kernel, qmin=qmin, qmax=qmax)
    return pl.pallas_call(
        kernel,
        out_shape=jax.ShapeDtypeStruct((rows, lanes), x2d.dtype),
        grid=grid,
        in_specs=[
            pl.BlockSpec((1, 1), lambda i: (0, 0)),        # min_val
            pl.BlockSpec((1, 1), lambda i: (0, 0)),        # max_val
            pl.BlockSpec((tr, lanes), lambda i: (i, 0)),   # x tile
        ],
        out_specs=pl.BlockSpec((tr, lanes), lambda i: (i, 0)),
        compiler_params=pltpu.CompilerParams(
            dimension_semantics=("parallel",)),
    )(min_val, max_val, x2d)


# ----------------------------------------------------------------------------
# QuantizeBase forward (functional): calibration flag -> observe, quantization
# flag -> fake-quantize.  qscheme: per-tensor affine, quant range [qmin, qmax].
# ----------------------------------------------------------------------------
class QuantizeBase:
    def __init__(self, qmin=0, qmax=255, block_rows=DEFAULT_BLOCK_ROWS):
        self.qmin = qmin
        self.qmax = qmax
        self.block_rows = block_rows
        # buffers, default True as in the PyTorch module
        self.calibration = True
        self.quantization = True
        # observer state: (1, 1) f32 arrays once calibrated
        self.min_val = None
        self.max_val = None
        # TODO(synk): get_extra_state / set_extra_state are checkpoint-only
        # plumbing with no Pallas equivalent; omitted.

    def __call__(self, x):
        orig_shape = x.shape
        orig_dtype = x.dtype

        flat = x.reshape(-1)  # native dtype; cast happens inside the kernels
        total = flat.shape[0]
        pad = (-total) % LANE
        if pad:
            # TODO(synk): rare ragged-lane fallback still pays one concat copy;
            # the hot path (lane-divisible activations) never takes it.  Pad
            # with an existing value so the observer min/max is unaffected.
            flat = jnp.concatenate(
                [flat, jnp.broadcast_to(flat[:1], (pad,)).astype(flat.dtype)])
        x2d = flat.reshape(-1, LANE)
        rows = x2d.shape[0]
        # Single full block when the tensor is small; otherwise (block_rows, 128)
        # tiles (block_rows is a multiple of 8, ragged tails handled in-kernel).
        tr = rows if rows <= self.block_rows else self.block_rows

        if self.calibration:
            self.min_val, self.max_val = _observe_min_max(x2d, tr)

        if self.quantization:
            if self.min_val is None or self.max_val is None:
                raise RuntimeError(
                    "quantization requested before any calibration pass")
            y2d = _fake_quantize_2d(
                x2d, self.min_val, self.max_val, self.qmin, self.qmax, tr)
            y = y2d.reshape(-1)
            if pad:
                y = y[:total]
            return y.reshape(orig_shape).astype(orig_dtype)
        return x


# ----------------------------------------------------------------------------
# Reference (pure JAX) — same formulation (x * inv_scale) for a tight check.
# ----------------------------------------------------------------------------
def _reference(x, qmin=0, qmax=255):
    xf = x.astype(jnp.float32)
    minv = jnp.minimum(jnp.min(xf), 0.0)
    maxv = jnp.maximum(jnp.max(xf), 0.0)
    scale = jnp.maximum((maxv - minv) / jnp.float32(qmax - qmin),
                        jnp.float32(jnp.finfo(jnp.float32).eps))
    inv_scale = jnp.float32(1.0) / scale
    zp = jnp.clip(jnp.round(qmin - minv * inv_scale), qmin, qmax)
    q = jnp.clip(jnp.round(xf * inv_scale) + zp, qmin, qmax)
    return ((q - zp) * scale).astype(x.dtype)


if __name__ == "__main__":
    key = jax.random.PRNGKey(0)
    # NCHW, small shapes: batch=2, channels=4, spatial=16
    x = jax.random.normal(key, (2, 4, 16, 16), dtype=jnp.float32) * 3.0 + 0.5

    module = QuantizeBase(qmin=0, qmax=255)
    y = jax.block_until_ready(module(x))
    y_ref = _reference(x)
    assert y.shape == x.shape and y.dtype == x.dtype
    assert float(jnp.max(jnp.abs(y - y_ref))) < 1e-4, "mismatch vs reference"

    # Second check: exercise the multi-step grid reduction and the ragged
    # last-block masking path (rows=20, block_rows=8 -> grid of 3, tail of 4).
    key2 = jax.random.PRNGKey(1)
    x2 = jax.random.normal(key2, (2, 4, 16, 20), dtype=jnp.float32) * 2.0 - 0.3
    module2 = QuantizeBase(qmin=0, qmax=255, block_rows=8)
    y2 = jax.block_until_ready(module2(x2))
    y2_ref = _reference(x2)
    assert y2.shape == x2.shape and y2.dtype == x2.dtype
    assert float(jnp.max(jnp.abs(y2 - y2_ref))) < 1e-4, "mismatch (ragged grid)"

    print("KERNEL_OK")
</pallas_src>

<mosaic_0001>
module attributes {stable_mosaic.version = 11 : i64} {
  func.func @_observer_kernel(%arg0: i32, %arg1: memref<16x128xf32, #tpu.memory_space<vmem>>, %arg2: memref<1x1xf32, #tpu.memory_space<vmem>>, %arg3: memref<1x1xf32, #tpu.memory_space<vmem>>, %arg4: memref<1x1xf32, #tpu.memory_space<vmem>>, %arg5: memref<1x1xf32, #tpu.memory_space<vmem>>) attributes {dimension_semantics = [#tpu.dimension_semantics<arbitrary>], iteration_bounds = array<i64: 1>, scalar_prefetch = 0 : i64, scratch_operands = 2 : i64, tpu.core_type = #tpu.core_type<tc>, window_params = [{transform_indices = @transform_0, window_bounds = array<i64: 16, 128>}, {pipeline_mode = #tpu.pipeline_mode<synchronous>, transform_indices = @transform_1, window_bounds = array<i64: 1, 1>}, {pipeline_mode = #tpu.pipeline_mode<synchronous>, transform_indices = @transform_2, window_bounds = array<i64: 1, 1>}]} {
    %c0_i32 = arith.constant 0 : i32
    %0 = arith.cmpi eq, %arg0, %c0_i32 : i32
    %1 = arith.extui %0 : i1 to i32
    %c0_i32_0 = arith.constant 0 : i32
    %2 = arith.cmpi ne, %1, %c0_i32_0 : i32
    scf.if %2 {
      %cst_13 = arith.constant 0x7F800000 : f32
      %23 = vector.broadcast %cst_13 : f32 to vector<1x1xf32>
      %c0_14 = arith.constant 0 : index
      %c0_15 = arith.constant 0 : index
      %24 = vector.load %arg4[%c0_14, %c0_15] : memref<1x1xf32, #tpu.memory_space<vmem>>, vector<1x1xf32>
      tpu.vector_store %arg4[%c0_14, %c0_15], %23 {strides = array<i32>} : memref<1x1xf32, #tpu.memory_space<vmem>>, vector<1x1xf32>,
      %cst_16 = arith.constant 0xFF800000 : f32
      %25 = vector.broadcast %cst_16 : f32 to vector<1x1xf32>
      %c0_17 = arith.constant 0 : index
      %c0_18 = arith.constant 0 : index
      %26 = vector.load %arg5[%c0_17, %c0_18] : memref<1x1xf32, #tpu.memory_space<vmem>>, vector<1x1xf32>
      tpu.vector_store %arg5[%c0_17, %c0_18], %25 {strides = array<i32>} : memref<1x1xf32, #tpu.memory_space<vmem>>, vector<1x1xf32>,
    } else {
    }
    %c0 = arith.constant 0 : index
    %c0_1 = arith.constant 0 : index
    %3 = vector.load %arg1[%c0, %c0_1] : memref<16x128xf32, #tpu.memory_space<vmem>>, vector<16x128xf32>
    %c0_2 = arith.constant 0 : index
    %c0_3 = arith.constant 0 : index
    %4 = vector.load %arg4[%c0_2, %c0_3] : memref<1x1xf32, #tpu.memory_space<vmem>>, vector<1x1xf32>
    %5 = vector.shape_cast %3 : vector<16x128xf32> to vector<1x16x128xf32>
    %cst = arith.constant dense<0x7F800000> : vector<1xf32>
    %6 = vector.multi_reduction <minimumf>, %5, %cst [1, 2] : vector<1x16x128xf32> to vector<1xf32>
    %7 = vector.shape_cast %6 : vector<1xf32> to vector<1x1x1xf32>
    %8 = vector.extract %7[0, 0, 0] : f32 from vector<1x1x1xf32>
    %9 = vector.broadcast %8 : f32 to vector<1x1xf32>
    %10 = arith.minimumf %4, %9 : vector<1x1xf32>
    %c0_4 = arith.constant 0 : index
    %c0_5 = arith.constant 0 : index
    %11 = vector.load %arg4[%c0_4, %c0_5] : memref<1x1xf32, #tpu.memory_space<vmem>>, vector<1x1xf32>
    tpu.vector_store %arg4[%c0_4, %c0_5], %10 {strides = array<i32>} : memref<1x1xf32, #tpu.memory_space<vmem>>, vector<1x1xf32>,
    %c0_6 = arith.constant 0 : index
    %c0_7 = arith.constant 0 : index
    %12 = vector.load %arg5[%c0_6, %c0_7] : memref<1x1xf32, #tpu.memory_space<vmem>>, vector<1x1xf32>
    %13 = vector.shape_cast %3 : vector<16x128xf32> to vector<1x16x128xf32>
    %cst_8 = arith.constant dense<0xFF800000> : vector<1xf32>
    %14 = vector.multi_reduction <maximumf>, %13, %cst_8 [1, 2] : vector<1x16x128xf32> to vector<1xf32>
    %15 = vector.shape_cast %14 : vector<1xf32> to vector<1x1x1xf32>
    %16 = vector.extract %15[0, 0, 0] : f32 from vector<1x1x1xf32>
    %17 = vector.broadcast %16 : f32 to vector<1x1xf32>
    %18 = arith.maximumf %12, %17 : vector<1x1xf32>
    %c0_9 = arith.constant 0 : index
    %c0_10 = arith.constant 0 : index
    %19 = vector.load %arg5[%c0_9, %c0_10] : memref<1x1xf32, #tpu.memory_space<vmem>>, vector<1x1xf32>
    tpu.vector_store %arg5[%c0_9, %c0_10], %18 {strides = array<i32>} : memref<1x1xf32, #tpu.memory_space<vmem>>, vector<1x1xf32>,
    %c0_i32_11 = arith.constant 0 : i32
    %20 = arith.cmpi eq, %arg0, %c0_i32_11 : i32
    %21 = arith.extui %20 : i1 to i32
    %c0_i32_12 = arith.constant 0 : i32
    %22 = arith.cmpi ne, %21, %c0_i32_12 : i32
    scf.if %22 {
      %c0_13 = arith.constant 0 : index
      %c0_14 = arith.constant 0 : index
      %23 = vector.load %arg4[%c0_13, %c0_14] : memref<1x1xf32, #tpu.memory_space<vmem>>, vector<1x1xf32>
      %c0_15 = arith.constant 0 : index
      %c0_16 = arith.constant 0 : index
      %24 = vector.load %arg2[%c0_15, %c0_16] : memref<1x1xf32, #tpu.memory_space<vmem>>, vector<1x1xf32>
      tpu.vector_store %arg2[%c0_15, %c0_16], %23 {strides = array<i32>} : memref<1x1xf32, #tpu.memory_space<vmem>>, vector<1x1xf32>,
      %c0_17 = arith.constant 0 : index
      %c0_18 = arith.constant 0 : index
      %25 = vector.load %arg5[%c0_17, %c0_18] : memref<1x1xf32, #tpu.memory_space<vmem>>, vector<1x1xf32>
      %c0_19 = arith.constant 0 : index
      %c0_20 = arith.constant 0 : index
      %26 = vector.load %arg3[%c0_19, %c0_20] : memref<1x1xf32, #tpu.memory_space<vmem>>, vector<1x1xf32>
      tpu.vector_store %arg3[%c0_19, %c0_20], %25 {strides = array<i32>} : memref<1x1xf32, #tpu.memory_space<vmem>>, vector<1x1xf32>,
    } else {
    }
    return
  }
  func.func @transform_0(%arg0: i32) -> (i32, i32) {
    %c0_i32 = arith.constant 0 : i32
    %c0_i32_0 = arith.constant 0 : i32
    return %arg0, %c0_i32 : i32, i32
  }
  func.func @transform_1(%arg0: i32) -> (i32, i32) {
    %c0_i32 = arith.constant 0 : i32
    %c0_i32_0 = arith.constant 0 : i32
    %c0_i32_1 = arith.constant 0 : i32
    return %c0_i32, %c0_i32_0 : i32, i32
  }
  func.func @transform_2(%arg0: i32) -> (i32, i32) {
    %c0_i32 = arith.constant 0 : i32
    %c0_i32_0 = arith.constant 0 : i32
    %c0_i32_1 = arith.constant 0 : i32
    return %c0_i32, %c0_i32_0 : i32, i32
  }
}

</mosaic_0001>

<llo_original>
// kernel: tpu_custom_call.1
$region0: #{tpu_custom_call.1}
  #allocation0 [shape = 'u32[]', space=smem, size = 0x4, offset = 0x4, fixed_abs, tag = 'smem constant byte address 0x4 - core index']
  #allocation1 [shape = 'u32[144,128]{1,0:T(1,128)}', space=vmem, size = 0x12000, scoped, tag = 'internal scratch']
  #allocation2 [shape = 'f32[1,1]{1,0:T(1,128)}', space=vmem, size = 0x200, scoped, tag = 'scratch operand']
  #allocation3 [shape = 'f32[1,1]{1,0:T(1,128)}', space=vmem, size = 0x200, scoped, tag = 'scratch operand']
  %s0 = inlined_call_operand.hbm [shape: f32[16,128], index: 0, kind: input, shape index: {}]
  %s1 = inlined_call_operand.hbm [shape: f32[1,1], index: 1, kind: output, shape index: {0}]
  %s2 = inlined_call_operand.hbm [shape: f32[1,1], index: 2, kind: output, shape index: {1}]
  %3 = xla_tuple %s1, %s2
  %s4 = sld [smem:[#allocation0]]
  $region34: #{tpu_custom_call.1} parent=0
    _
  %s6 = ssub.s32 1, %s4
  %s7 = scalar_select 0, %s6, %s4
  $region1: #{tpu_custom_call.1} parent=0
    #allocation4 [shape = 'u8[8192]{0}', space=vmem, size = 0x2000, scoped, tag = 'input window, operand 0, single buffered']
    #allocation5 [shape = 's32[1]{0}', space=sflag, size = 0x4, scoped, tag = 'scoped memory for tpu_custom_call.1']
    #allocation6 [shape = 's32[1]{0}', space=sflag, size = 0x4, scoped, tag = 'scoped memory for tpu_custom_call.1']
    #allocation7 [shape = 'u8[512]{0}', space=vmem, size = 0x400, scoped, tag = 'output window, operand 0, single buffered']
    #allocation8 [shape = 'u8[512]{0}', space=vmem, size = 0x400, scoped, tag = 'output window, operand 1, single buffered']
    #allocation9 [shape = 's32[1]{0}', space=sflag, size = 0x4, scoped, tag = 'scoped memory for tpu_custom_call.1']
    %8 = vsyncpa [#allocation5], 0
    %9 = vsyncpa [#allocation6], 0
    %10 = vsyncpa [#allocation9], 0
    // Predicated region
    $region2: #{tpu_custom_call.1} parent=1 // pred_check
      _
    $region3: #{tpu_custom_call.1} parent=1 // pred_check_branch
      %12 = sbr.rel (0) target = $region5
    $region4: #{tpu_custom_call.1} parent=1 // pred_region
      %s14 = ssub.s32 256, 256
      %15 = vsyncadd [#allocation5], %s14
      %s16 = sshll.u32 [#allocation4], 4
      %s17 = int_to_ptr.vmem [resolvable:$true] %s16
      %22 = dma.hbm_to_vmem [thread:$0]  %s0, 256, %s17, [#allocation5], 128, 128, 8
    $region5: #{tpu_custom_call.1} parent=1 // pred_fallthru
      _
    // Predicated region
    $region6: #{tpu_custom_call.1} parent=1 // pred_check
      _
    $region7: #{tpu_custom_call.1} parent=1 // pred_check_branch
      %24 = sbr.rel (0) target = $region9
    $region8: #{tpu_custom_call.1} parent=1 // pred_region
      %25 = dma.done [#allocation5], 256
    $region9: #{tpu_custom_call.1} parent=1 // pred_fallthru
      _
    %p26 = scmp.eq.s32.totalorder 0, 0
    // Predicated region
    $region10: #{tpu_custom_call.1} parent=1 // pred_check
      %p27 = pneg %p26
    $region11: #{tpu_custom_call.1} parent=1 // pred_check_branch
      %29 = sbr.rel (%p27) target = $region13
    $region12: #{tpu_custom_call.1} parent=1 // pred_region
      %vm30 = vcmask 0
      %31 = vst.msk [vmem:[#allocation2] sm:$0x1] %vm30, inf
      %32 = vst.msk [vmem:[#allocation3] sm:$0x1] %vm30, -inf
    $region13: #{tpu_custom_call.1} parent=1 // pred_fallthru
      _
    %v33 = vld [vmem:[#allocation4] sm:$0xff]
    %v34 = vld [vmem:[#allocation4 + $0x8] sm:$0xff]
    %v35 = vld [vmem:[#allocation2] sm:$0x1]
    %v36 = vmin.f32 %v33, %v34
    %37 = vmin.xlane.f32.xlu0 %v36
    %v38 = vpop.xlane.xlu0 %37
    %v39 = vrot.slane %v38, 4
    %v40 = vmin.f32 %v38, %v39
    %v41 = vrot.slane %v40, 2
    %v42 = vmin.f32 %v40, %v41
    %v43 = vrot.slane %v42, 1
    %v44 = vmin.f32 %v42, %v43
    %s45 = vtos %v44
    %v46 = vstv %s45
    %v47 = vmin.f32 %v35, %v46
    %vm48 = vcmask 0
    %49 = vst.msk [vmem:[#allocation2] sm:$0x1] %vm48, %v47
    %v50 = vld [vmem:[#allocation3] sm:$0x1]
    %v51 = vmax.f32 %v33, %v34
    %52 = vmax.xlane.f32.xlu0 %v51
    %v53 = vpop.xlane.xlu0 %52
    %v54 = vrot.slane %v53, 4
    %v55 = vmax.f32 %v53, %v54
    %v56 = vrot.slane %v55, 2
    %v57 = vmax.f32 %v55, %v56
    %v58 = vrot.slane %v57, 1
    %v59 = vmax.f32 %v57, %v58
    %s60 = vtos %v59
    %v61 = vstv %s60
    %v62 = vmax.f32 %v50, %v61
    %63 = vst.msk [vmem:[#allocation3] sm:$0x1] %vm48, %v62
    // Predicated region
    $region14: #{tpu_custom_call.1} parent=1 // pred_check
      %p64 = pneg %p26
    $region15: #{tpu_custom_call.1} parent=1 // pred_check_branch
      %66 = sbr.rel (%p64) target = $region17
    $region16: #{tpu_custom_call.1} parent=1 // pred_region
      %v67 = vld [vmem:[#allocation2] sm:$0x1]
      %68 = vst.msk [vmem:[#allocation7] sm:$0x1] %vm48, %v67
      %v69 = vld [vmem:[#allocation3] sm:$0x1]
      %70 = vst.msk [vmem:[#allocation8] sm:$0x1] %vm48, %v69
    $region17: #{tpu_custom_call.1} parent=1 // pred_fallthru
      _
    // Predicated region
    $region18: #{tpu_custom_call.1} parent=1 // pred_check
      _
    $region19: #{tpu_custom_call.1} parent=1 // pred_check_branch
      %72 = sbr.rel (0) target = $region21
    $region20: #{tpu_custom_call.1} parent=1 // pred_region
      %s74 = ssub.s32 16, 16
      %75 = vsyncadd [#allocation6], %s74
      %s77 = sshll.u32 [#allocation7], 4
      %s78 = int_to_ptr.vmem [resolvable:$true] %s77
      %80 = dma.vmem_to_hbm [thread:$0]  %s78, 16, %s1, [#allocation6]
    $region21: #{tpu_custom_call.1} parent=1 // pred_fallthru
      _
    // Predicated region
    $region22: #{tpu_custom_call.1} parent=1 // pred_check
      _
    $region23: #{tpu_custom_call.1} parent=1 // pred_check_branch
      %82 = sbr.rel (0) target = $region25
    $region24: #{tpu_custom_call.1} parent=1 // pred_region
      %s84 = ssub.s32 16, 16
      %85 = vsyncadd [#allocation9], %s84
      %s87 = sshll.u32 [#allocation8], 4
      %s88 = int_to_ptr.vmem [resolvable:$true] %s87
      %90 = dma.vmem_to_hbm [thread:$0]  %s88, 16, %s2, [#allocation9]
    $region25: #{tpu_custom_call.1} parent=1 // pred_fallthru
      _
    // Predicated region
    $region26: #{tpu_custom_call.1} parent=1 // pred_check
      _
    $region27: #{tpu_custom_call.1} parent=1 // pred_check_branch
      %92 = sbr.rel (0) target = $region29
    $region28: #{tpu_custom_call.1} parent=1 // pred_region
      %93 = dma.done [#allocation6], 16
    $region29: #{tpu_custom_call.1} parent=1 // pred_fallthru
      _
    // Predicated region
    $region30: #{tpu_custom_call.1} parent=1 // pred_check
      _
    $region31: #{tpu_custom_call.1} parent=1 // pred_check_branch
      %95 = sbr.rel (0) target = $region33
    $region32: #{tpu_custom_call.1} parent=1 // pred_region
      %96 = dma.done [#allocation9], 16
    $region33: #{tpu_custom_call.1} parent=1 // pred_fallthru
      _
    %97 = vsyncpa [#allocation5], 1
    %98 = vsyncpa [#allocation6], 1
    %99 = vsyncpa [#allocation9], 1

</llo_original>
